<compile_context>
chip_gen: v5e
topology: v5e:2x2
jax: 0.10.0
libtpu: 0.0.40
codegen_flags: <defaults>
</compile_context>

<pallas_src>
import functools
import math

import jax
import jax.numpy as jnp
from jax.experimental import pallas as pl
from jax.experimental.pallas import tpu as pltpu


def mlp_layer_kernel(x_ref, w_ref, b_ref, o_ref, *, apply_relu):
    """One grid step = one (token tile) x (d_hidden tile) through Linear (+ReLU).

    x_ref: (TM, d_model)   token tile (streams along inner grid axis)
    w_ref: (d_model, TN)   weight column slab (resident across inner axis)
    b_ref: (1, TN)         bias slab (f32)
    o_ref: (TM, TN)        output tile (model dtype)
    """
    acc = jnp.dot(x_ref[...], w_ref[...], preferred_element_type=jnp.float32)
    acc = acc + b_ref[...].astype(jnp.float32)      # f32 VPU path (v5e-safe)
    if apply_relu:
        acc = jnp.maximum(acc, 0.0)
    o_ref[...] = acc.astype(o_ref.dtype)


def mlp_layer_forward(x, w, b, *, apply_relu=True, block_tokens=512, block_cols=1024):
    """x: (..., d_model), w: (d_model, d_hidden) = nn.Linear.weight.T, b: (d_hidden,).

    Returns (..., d_hidden) in x.dtype. Pass x / w already in the compute dtype
    (e.g. bf16) — no casts are done here.
    """
    *lead, d_model = x.shape
    d_hidden = w.shape[-1]
    assert w.shape[0] == d_model and b.shape == (d_hidden,)

    n_tok = int(math.prod(lead)) if lead else 1
    x_flat = x.reshape(n_tok, d_model)
    b2 = b.reshape(1, d_hidden).astype(jnp.float32)

    # ---- tile sizes --------------------------------------------------------
    # Token tile: multiple of 8 sublanes; ragged last block is masked by Pallas.
    tm = max(8, min(int(block_tokens), n_tok))
    tm = ((tm + 7) // 8) * 8
    # d_hidden tile: full extent if it fits, else a multiple of 256 (feeds the
    # 2x256^2 MXU on v6e/v7x; also a 128-multiple for v5e and lane-dense stores).
    if d_hidden <= int(block_cols):
        tn = d_hidden
    else:
        tn = max(256, (int(block_cols) // 256) * 256)

    gi = pl.cdiv(n_tok, tm)       # token blocks  (inner axis)
    gj = pl.cdiv(d_hidden, tn)    # column blocks (outer axis: weight slab resident)
    grid = (gj, gi)

    out_dtype = x.dtype
    out_shape = jax.ShapeDtypeStruct((n_tok, d_hidden), out_dtype)

    # ---- VMEM budget from the actual tile footprint -------------------------
    def _vmem_limit(w_buffers):
        bytes_x = 2 * tm * d_model * x_flat.dtype.itemsize          # double-buffered
        bytes_o = 2 * tm * tn * jnp.dtype(out_dtype).itemsize       # double-buffered
        bytes_w = w_buffers * d_model * tn * w.dtype.itemsize
        bytes_b = w_buffers * tn * 4
        total = bytes_x + bytes_o + bytes_w + bytes_b
        # +16 MiB headroom for compiler scratch; clamp to a range safe on all gens.
        return int(min(max(total + (16 << 20), 24 << 20), 48 << 20))

    kernel = functools.partial(mlp_layer_kernel, apply_relu=apply_relu)

    def _build(single_buffer_resident):
        res_kwargs = (
            dict(pipeline_mode=pl.Buffered(1)) if single_buffer_resident else {})
        w_buffers = 1 if single_buffer_resident else 2
        return pl.pallas_call(
            kernel,
            out_shape=out_shape,
            grid_spec=pltpu.PrefetchScalarGridSpec(
                num_scalar_prefetch=0,
                grid=grid,
                in_specs=[
                    # token tile: streams along the inner grid axis
                    pl.BlockSpec((tm, d_model), lambda j, i: (i, 0)),
                    # weight / bias column slab: constant across the inner axis
                    pl.BlockSpec((d_model, tn), lambda j, i: (0, j), **res_kwargs),
                    pl.BlockSpec((1, tn), lambda j, i: (0, j), **res_kwargs),
                ],
                out_specs=pl.BlockSpec((tm, tn), lambda j, i: (i, j)),
            ),
            compiler_params=pltpu.CompilerParams(
                # both axes independent -> megacore / v7x TCs can split either
                dimension_semantics=("parallel", "parallel"),
                vmem_limit_bytes=_vmem_limit(w_buffers),
            ),
        )

    # Single-buffer the resident weight/bias only when their block index is
    # constant over the whole grid (gj == 1): nothing to prefetch, so the
    # second buffer would be pure VMEM waste.
    want_single = (gj == 1)
    try:
        out = _build(want_single)(x_flat, w, b2)
    except Exception:
        if not want_single:
            raise
        # Fallback for jax versions that reject Buffered(1): default buffering.
        out = _build(False)(x_flat, w, b2)

    return out.reshape(*lead, d_hidden)


def reference_forward(x, w, b, apply_relu=True):
    """Pure-JAX f32 reference mirroring the PyTorch module (returns f32)."""
    h = x.astype(jnp.float32) @ w.astype(jnp.float32) + b.astype(jnp.float32)
    if apply_relu:
        h = jnp.maximum(h, 0.0)
    return h


if __name__ == "__main__":
    # Small shapes consistent with MLPLayer(d_model, d_hidden) on (batch, seq, d_model).
    B, S, d_model, d_hidden = 2, 128, 64, 128

    key = jax.random.PRNGKey(0)
    kx, kw, kb = jax.random.split(key, 3)
    # Model dtype = bf16: activations and the (cast-once, parameter-level) weight
    # are stored in bf16; the bias stays f32 and is added in f32 on the VPU.
    x = jax.random.normal(kx, (B, S, d_model), dtype=jnp.float32).astype(jnp.bfloat16)
    w = (0.1 * jax.random.normal(kw, (d_model, d_hidden), dtype=jnp.float32)
         ).astype(jnp.bfloat16)
    b = 0.1 * jax.random.normal(kb, (d_hidden,), dtype=jnp.float32)

    # Divisible token count (n_tok = 256, TM = 128).
    ref = reference_forward(x, w, b)
    out = jax.block_until_ready(mlp_layer_forward(x, w, b, block_tokens=128))
    assert out.shape == (B, S, d_hidden), out.shape
    assert out.dtype == x.dtype, out.dtype
    assert jnp.allclose(out.astype(jnp.float32), ref, atol=2e-2, rtol=2e-2), \
        "bf16 kernel mismatch vs f32 reference"

    # Ragged token count (n_tok = 200, TM = 128): exercises the cdiv grid with a
    # masked last block instead of host-side pad + slice.
    x_ragged = x[:, :100, :]
    ref_r = reference_forward(x_ragged, w, b)
    out_r = jax.block_until_ready(mlp_layer_forward(x_ragged, w, b, block_tokens=128))
    assert out_r.shape == (B, 100, d_hidden), out_r.shape
    assert jnp.allclose(out_r.astype(jnp.float32), ref_r, atol=2e-2, rtol=2e-2), \
        "ragged-block kernel mismatch vs f32 reference"

    print("KERNEL_OK")
</pallas_src>

<mosaic_0001>
module attributes {stable_mosaic.version = 11 : i64} {
  func.func @mlp_layer_kernel(%arg0: i32, %arg1: i32, %arg2: memref<128x64xbf16, #tpu.memory_space<vmem>>, %arg3: memref<64x128xbf16, #tpu.memory_space<vmem>>, %arg4: memref<1x128xf32, #tpu.memory_space<vmem>>, %arg5: memref<128x128xbf16, #tpu.memory_space<vmem>>) attributes {dimension_semantics = [#tpu.dimension_semantics<parallel>, #tpu.dimension_semantics<parallel>], iteration_bounds = array<i64: 1, 2>, scalar_prefetch = 0 : i64, scratch_operands = 0 : i64, tpu.core_type = #tpu.core_type<tc>, window_params = [{transform_indices = @transform_0, window_bounds = array<i64: 128, 64>}, {pipeline_mode = #tpu.pipeline_mode<synchronous>, transform_indices = @transform_1, window_bounds = array<i64: 64, 128>}, {pipeline_mode = #tpu.pipeline_mode<synchronous>, transform_indices = @transform_2, window_bounds = array<i64: 1, 128>}, {transform_indices = @transform_3, window_bounds = array<i64: 128, 128>}]} {
    %c0 = arith.constant 0 : index
    %c0_0 = arith.constant 0 : index
    %0 = vector.load %arg2[%c0, %c0_0] : memref<128x64xbf16, #tpu.memory_space<vmem>>, vector<128x64xbf16>
    %c0_1 = arith.constant 0 : index
    %c0_2 = arith.constant 0 : index
    %1 = vector.load %arg3[%c0_1, %c0_2] : memref<64x128xbf16, #tpu.memory_space<vmem>>, vector<64x128xbf16>
    %cst = arith.constant dense<0.000000e+00> : vector<128x128xf32>
    %2 = tpu.matmul %0, %1, %cst {dimension_numbers = #tpu.dot_dimension_numbers<[1], [0], [0], [1], [0, 0, 1, 1], [], []>} : vector<128x64xbf16>, vector<64x128xbf16>, vector<128x128xf32> -> vector<128x128xf32>
    %c0_3 = arith.constant 0 : index
    %c0_4 = arith.constant 0 : index
    %3 = vector.load %arg4[%c0_3, %c0_4] : memref<1x128xf32, #tpu.memory_space<vmem>>, vector<1x128xf32>
    %4 = vector.broadcast %3 : vector<1x128xf32> to vector<128x128xf32>
    %5 = arith.addf %2, %4 : vector<128x128xf32>
    %cst_5 = arith.constant 0.000000e+00 : f32
    %6 = vector.broadcast %cst_5 : f32 to vector<128x128xf32>
    %7 = arith.maximumf %5, %6 : vector<128x128xf32>
    %8 = arith.truncf %7 : vector<128x128xf32> to vector<128x128xbf16>
    %c0_6 = arith.constant 0 : index
    %c0_7 = arith.constant 0 : index
    %9 = vector.load %arg5[%c0_6, %c0_7] : memref<128x128xbf16, #tpu.memory_space<vmem>>, vector<128x128xbf16>
    tpu.vector_store %arg5[%c0_6, %c0_7], %8 {strides = array<i32>} : memref<128x128xbf16, #tpu.memory_space<vmem>>, vector<128x128xbf16>,
    return
  }
  func.func @transform_0(%arg0: i32, %arg1: i32) -> (i32, i32) {
    %c0_i32 = arith.constant 0 : i32
    %c0_i32_0 = arith.constant 0 : i32
    return %arg1, %c0_i32 : i32, i32
  }
  func.func @transform_1(%arg0: i32, %arg1: i32) -> (i32, i32) {
    %c0_i32 = arith.constant 0 : i32
    %c0_i32_0 = arith.constant 0 : i32
    return %c0_i32, %arg0 : i32, i32
  }
  func.func @transform_2(%arg0: i32, %arg1: i32) -> (i32, i32) {
    %c0_i32 = arith.constant 0 : i32
    %c0_i32_0 = arith.constant 0 : i32
    return %c0_i32, %arg0 : i32, i32
  }
  func.func @transform_3(%arg0: i32, %arg1: i32) -> (i32, i32) {
    %c0_i32 = arith.constant 0 : i32
    return %arg1, %arg0 : i32, i32
  }
}

module attributes {stable_mosaic.version = 11 : i64} {
  func.func @mlp_layer_kernel(%arg0: i32, %arg1: i32, %arg2: memref<128x64xbf16, #tpu.memory_space<vmem>>, %arg3: memref<64x128xbf16, #tpu.memory_space<vmem>>, %arg4: memref<1x128xf32, #tpu.memory_space<vmem>>, %arg5: memref<128x128xbf16, #tpu.memory_space<vmem>>) attributes {dimension_semantics = [#tpu.dimension_semantics<parallel>, #tpu.dimension_semantics<parallel>], iteration_bounds = array<i64: 1, 2>, scalar_prefetch = 0 : i64, scratch_operands = 0 : i64, tpu.core_type = #tpu.core_type<tc>, window_params = [{transform_indices = @transform_0, window_bounds = array<i64: 128, 64>}, {transform_indices = @transform_1, window_bounds = array<i64: 64, 128>}, {transform_indices = @transform_2, window_bounds = array<i64: 1, 128>}, {transform_indices = @transform_3, window_bounds = array<i64: 128, 128>}]} {
    %c0 = arith.constant 0 : index
    %c0_0 = arith.constant 0 : index
    %0 = vector.load %arg2[%c0, %c0_0] : memref<128x64xbf16, #tpu.memory_space<vmem>>, vector<128x64xbf16>
    %c0_1 = arith.constant 0 : index
    %c0_2 = arith.constant 0 : index
    %1 = vector.load %arg3[%c0_1, %c0_2] : memref<64x128xbf16, #tpu.memory_space<vmem>>, vector<64x128xbf16>
    %cst = arith.constant dense<0.000000e+00> : vector<128x128xf32>
    %2 = tpu.matmul %0, %1, %cst {dimension_numbers = #tpu.dot_dimension_numbers<[1], [0], [0], [1], [0, 0, 1, 1], [], []>} : vector<128x64xbf16>, vector<64x128xbf16>, vector<128x128xf32> -> vector<128x128xf32>
    %c0_3 = arith.constant 0 : index
    %c0_4 = arith.constant 0 : index
    %3 = vector.load %arg4[%c0_3, %c0_4] : memref<1x128xf32, #tpu.memory_space<vmem>>, vector<1x128xf32>
    %4 = vector.broadcast %3 : vector<1x128xf32> to vector<128x128xf32>
    %5 = arith.addf %2, %4 : vector<128x128xf32>
    %cst_5 = arith.constant 0.000000e+00 : f32
    %6 = vector.broadcast %cst_5 : f32 to vector<128x128xf32>
    %7 = arith.maximumf %5, %6 : vector<128x128xf32>
    %8 = arith.truncf %7 : vector<128x128xf32> to vector<128x128xbf16>
    %c0_6 = arith.constant 0 : index
    %c0_7 = arith.constant 0 : index
    %9 = vector.load %arg5[%c0_6, %c0_7] : memref<128x128xbf16, #tpu.memory_space<vmem>>, vector<128x128xbf16>
    tpu.vector_store %arg5[%c0_6, %c0_7], %8 {strides = array<i32>} : memref<128x128xbf16, #tpu.memory_space<vmem>>, vector<128x128xbf16>,
    return
  }
  func.func @transform_0(%arg0: i32, %arg1: i32) -> (i32, i32) {
    %c0_i32 = arith.constant 0 : i32
    %c0_i32_0 = arith.constant 0 : i32
    return %arg1, %c0_i32 : i32, i32
  }
  func.func @transform_1(%arg0: i32, %arg1: i32) -> (i32, i32) {
    %c0_i32 = arith.constant 0 : i32
    %c0_i32_0 = arith.constant 0 : i32
    return %c0_i32, %arg0 : i32, i32
  }
  func.func @transform_2(%arg0: i32, %arg1: i32) -> (i32, i32) {
    %c0_i32 = arith.constant 0 : i32
    %c0_i32_0 = arith.constant 0 : i32
    return %c0_i32, %arg0 : i32, i32
  }
  func.func @transform_3(%arg0: i32, %arg1: i32) -> (i32, i32) {
    %c0_i32 = arith.constant 0 : i32
    return %arg1, %arg0 : i32, i32
  }
}

</mosaic_0001>

<llo_original>
// kernel: tpu_custom_call.1
$region0: #{tpu_custom_call.1}
  #allocation0 [shape = 'u32[]', space=smem, size = 0x4, offset = 0x4, fixed_abs, tag = 'smem constant byte address 0x4 - core index']
  #allocation1 [shape = 'u32[72,128]{1,0:T(1,128)}', space=vmem, size = 0x9000, scoped, tag = 'internal scratch']
  %s0 = inlined_call_operand.vmem [shape: bf16[256,64], index: 0, kind: input, shape index: {}]
  %s1 = inlined_call_operand.vmem [shape: bf16[64,128], index: 1, kind: input, shape index: {}]
  %s2 = inlined_call_operand.vmem [shape: f32[1,128], index: 2, kind: input, shape index: {}]
  %s3 = inlined_call_operand.hbm [shape: bf16[256,128], index: 3, kind: output, shape index: {}]
  %s4 = sld [smem:[#allocation0]]
  $region45: #{tpu_custom_call.1} parent=0
    _
  %s6 = ssub.s32 1, %s4
  %s7 = scalar_select 0, %s6, %s4
  $region1: #{tpu_custom_call.1} parent=0
    #allocation2 [shape = 'u8[65536]{0}', space=vmem, size = 0x10000, scoped, tag = 'output window, operand 0']
    #allocation3 [shape = 's32[2]{0}', space=sflag, size = 0x8, scoped, tag = 'scoped memory for tpu_custom_call.1']
    %8 = vsyncpa [#allocation3], 0
    %s9 = scalar_lea.sflag [#allocation3], 1
    %10 = vsyncpa %s9, 0
    loop: start=0, step=1, limit=4
    $region2: #{tpu_custom_call.1} parent=1 // loop_pre_header
      _
    $region3: #{tpu_custom_call.1} parent=1 // loop_header
      %s12 = sphi 0, %s16
      %p13 = scmp.ge.s32.totalorder %s12, 4
      %s19 = sphi 0, %s31
      %s20 = sphi 0, %s27
      %s21 = sphi 0, %s19
      %s22 = sphi 0, %s20
      %s23 = sphi 0, %s21
      %s24 = sphi 0, %s22
      %s34 = sphi 0, %s36
      %s37 = sphi 0, %s34
      %s38 = sphi 0, %s37
      %s54 = sphi 0, %s38
      %s60 = sphi 0, %s62
      %s63 = sphi 0, %s60
      %s64 = sphi 0, %s63
      %s80 = sphi 0, %s64
      %s86 = sphi 0, %s88
      %s89 = sphi 0, %s86
      %s90 = sphi 0, %s89
      %s106 = sphi 0, %s90
      %s114 = sphi 0, %s116
      %s117 = sphi 0, %s114
      %s118 = sphi 0, %s117
      %s134 = sphi 0, %s118
    $region4: #{tpu_custom_call.1} parent=1 // loop_header_branch
      %15 = sbr.rel (%p13) target = $region8
    $region5: #{tpu_custom_call.1} parent=1 // loop_body
      %s17 = ssub.s32 %s12, 1
      %s18 = ssub.s32 %s12, 2
      %s25 = sadd.s32 1, %s20
      %p26 = scmp.ge.s32.totalorder %s25, 2
      %s27 = scalar_select %p26, 0, %s25
      %s28 = sadd.s32 1, %s19
      %s29 = scalar_select %p26, %s28, %s19
      %p30 = scmp.ge.s32.totalorder %s29, 1
      %s31 = scalar_select %p30, 0, %s29
      %s32 = ssub.s32 %s20, %s27
      %p33 = scmp.eq.s32.totalorder %s32, 0
      %s35 = sadd.s32 %s34, 1
      %s36 = scalar_select %p33, %s34, %s35
      %p39 = pneg %p33
      %p40 = scmp.eq.s32.totalorder %s12, 1
      %p41 = por %p39, %p40
      %p42 = scmp.ne.s32.totalorder %s34, %s37
      %p43 = scmp.eq.s32.totalorder %s12, 0
      %p44 = por %p42, %p43
      %p45 = scmp.ne.s32.totalorder %s34, %s37
      %p46 = scmp.eq.s32.totalorder %s17, 1
      %p47 = por %p45, %p46
      %p48 = scmp.ne.s32.totalorder %s37, %s38
      %p49 = scmp.eq.s32.totalorder %s17, 0
      %p50 = por %p48, %p49
      %p51 = scmp.ne.s32.totalorder %s37, %s38
      %p52 = scmp.eq.s32.totalorder %s18, 1
      %p53 = por %p51, %p52
      %p55 = scmp.ne.s32.totalorder %s38, %s54
      %p56 = scmp.eq.s32.totalorder %s18, 0
      %p57 = por %p55, %p56
      %s58 = ssub.s32 %s19, %s31
      %p59 = scmp.eq.s32.totalorder %s58, 0
      %s61 = sadd.s32 %s60, 1
      %s62 = scalar_select %p59, %s60, %s61
      %p65 = pneg %p59
      %p66 = scmp.eq.s32.totalorder %s12, 1
      %p67 = por %p65, %p66
      %p68 = scmp.ne.s32.totalorder %s60, %s63
      %p69 = scmp.eq.s32.totalorder %s12, 0
      %p70 = por %p68, %p69
      %p71 = scmp.ne.s32.totalorder %s60, %s63
      %p72 = scmp.eq.s32.totalorder %s17, 1
      %p73 = por %p71, %p72
      %p74 = scmp.ne.s32.totalorder %s63, %s64
      %p75 = scmp.eq.s32.totalorder %s17, 0
      %p76 = por %p74, %p75
      %p77 = scmp.ne.s32.totalorder %s63, %s64
      %p78 = scmp.eq.s32.totalorder %s18, 1
      %p79 = por %p77, %p78
      %p81 = scmp.ne.s32.totalorder %s64, %s80
      %p82 = scmp.eq.s32.totalorder %s18, 0
      %p83 = por %p81, %p82
      %s84 = ssub.s32 %s19, %s31
      %p85 = scmp.eq.s32.totalorder %s84, 0
      %s87 = sadd.s32 %s86, 1
      %s88 = scalar_select %p85, %s86, %s87
      %p91 = pneg %p85
      %p92 = scmp.eq.s32.totalorder %s12, 1
      %p93 = por %p91, %p92
      %p94 = scmp.ne.s32.totalorder %s86, %s89
      %p95 = scmp.eq.s32.totalorder %s12, 0
      %p96 = por %p94, %p95
      %p97 = scmp.ne.s32.totalorder %s86, %s89
      %p98 = scmp.eq.s32.totalorder %s17, 1
      %p99 = por %p97, %p98
      %p100 = scmp.ne.s32.totalorder %s89, %s90
      %p101 = scmp.eq.s32.totalorder %s17, 0
      %p102 = por %p100, %p101
      %p103 = scmp.ne.s32.totalorder %s89, %s90
      %p104 = scmp.eq.s32.totalorder %s18, 1
      %p105 = por %p103, %p104
      %p107 = scmp.ne.s32.totalorder %s90, %s106
      %p108 = scmp.eq.s32.totalorder %s18, 0
      %p109 = por %p107, %p108
      %s110 = ssub.s32 %s20, %s27
      %s111 = ssub.s32 %s19, %s31
      %s112 = sor.u32 %s110, %s111
      %p113 = scmp.eq.s32.totalorder %s112, 0
      %s115 = sadd.s32 %s114, 1
      %s116 = scalar_select %p113, %s114, %s115
      %p119 = pneg %p113
      %p120 = scmp.eq.s32.totalorder %s12, 1
      %p121 = por %p119, %p120
      %p122 = scmp.ne.s32.totalorder %s114, %s117
      %p123 = scmp.eq.s32.totalorder %s12, 0
      %p124 = por %p122, %p123
      %p125 = scmp.ne.s32.totalorder %s114, %s117
      %p126 = scmp.eq.s32.totalorder %s17, 1
      %p127 = por %p125, %p126
      %p128 = scmp.ne.s32.totalorder %s117, %s118
      %p129 = scmp.eq.s32.totalorder %s17, 0
      %p130 = por %p128, %p129
      %p131 = scmp.ne.s32.totalorder %s117, %s118
      %p132 = scmp.eq.s32.totalorder %s18, 1
      %p133 = por %p131, %p132
      %p135 = scmp.ne.s32.totalorder %s118, %s134
      %p136 = scmp.eq.s32.totalorder %s18, 0
      %p137 = por %p135, %p136
      %p138 = scmp.le.s32.totalorder 1, %s12
      %p139 = scmp.lt.s32.totalorder %s12, 3
      %p140 = pnand %p138, %p139
      %p141 = pneg %p140
      // Predicated region
      $region9: #{tpu_custom_call.1} parent=5 // pred_check
        _
      $region10: #{tpu_custom_call.1} parent=5 // pred_check_branch
        %143 = sbr.rel (%p140) target = $region12
      $region11: #{tpu_custom_call.1} parent=5 // pred_region
        %s144 = ssub.s32 %s12, 1
        // Predicated region
        $region13: #{tpu_custom_call.1} parent=11 // pred_check
          %p145 = pneg %p76
        $region14: #{tpu_custom_call.1} parent=11 // pred_check_branch
          %147 = sbr.rel (%p145) target = $region16
        $region15: #{tpu_custom_call.1} parent=11 // pred_region
          %p148 = scmp.lt.s32.totalorder %s21, 0
          %s149 = scalar_select %p148, %s21, 0
          %s150 = smul.addr %s149, 4
          %s151 = scalar_lea.vmem %s1, %s150
        $region16: #{tpu_custom_call.1} parent=11 // pred_fallthru
          _
        // Predicated region
        $region17: #{tpu_custom_call.1} parent=11 // pred_check
          %p152 = pneg %p102
        $region18: #{tpu_custom_call.1} parent=11 // pred_check_branch
          %154 = sbr.rel (%p152) target = $region20
        $region19: #{tpu_custom_call.1} parent=11 // pred_region
          %p155 = scmp.lt.s32.totalorder %s21, 0
          %s156 = scalar_select %p155, %s21, 0
          %s157 = scalar_lea.vmem %s2, %s156
        $region20: #{tpu_custom_call.1} parent=11 // pred_fallthru
          _
      $region12: #{tpu_custom_call.1} parent=5 // pred_fallthru
        _
      %p158 = scmp.lt.s32.totalorder %s12, 2
      // Predicated region
      $region21: #{tpu_custom_call.1} parent=5 // pred_check
        %p159 = pneg %p158
      $region22: #{tpu_custom_call.1} parent=5 // pred_check_branch
        %161 = sbr.rel (%p159) target = $region24
      $region23: #{tpu_custom_call.1} parent=5 // pred_region
        // Predicated region
        $region25: #{tpu_custom_call.1} parent=23 // pred_check
          %p162 = pneg %p44
        $region26: #{tpu_custom_call.1} parent=23 // pred_check_branch
          %164 = sbr.rel (%p162) target = $region28
        $region27: #{tpu_custom_call.1} parent=23 // pred_region
          %s165 = smul.u32 16, %s20
          %p166 = scmp.lt.s32.totalorder %s165, 31
          %s167 = scalar_select %p166, %s165, 31
          %s168 = smul.addr %s167, 4
          %s169 = scalar_lea.vmem %s0, %s168
          %s170 = smul.u32 16, %s20
        $region28: #{tpu_custom_call.1} parent=23 // pred_fallthru
          _
      $region24: #{tpu_custom_call.1} parent=5 // pred_fallthru
        _
      %p171 = scmp.le.s32.totalorder 1, %s12
      %p172 = scmp.lt.s32.totalorder %s12, 3
      %p173 = pnand %p171, %p172
      %p174 = pneg %p173
      // Predicated region
      $region29: #{tpu_custom_call.1} parent=5 // pred_check
        _
      $region30: #{tpu_custom_call.1} parent=5 // pred_check_branch
        %176 = sbr.rel (%p173) target = $region32
      $region31: #{tpu_custom_call.1} parent=5 // pred_region
        %s177 = ssub.s32 %s12, 1
        %s178 = smul.u32 16, %s22
        %p179 = scmp.lt.s32.totalorder %s178, 31
        %s180 = scalar_select %p179, %s178, 31
        %s181 = smul.addr %s180, 4
        %s182 = scalar_lea.vmem %s0, %s181
        %p183 = pneg %p50
        %p184 = pneg %p47
        %p185 = scmp.lt.s32.totalorder %s21, 0
        %s186 = scalar_select %p185, %s21, 0
        %s187 = smul.addr %s186, 4
        %s188 = scalar_lea.vmem %s1, %s187
        %p189 = pneg %p76
        %p190 = pneg %p73
        %p191 = scmp.lt.s32.totalorder %s21, 0
        %s192 = scalar_select %p191, %s21, 0
        %s193 = scalar_lea.vmem %s2, %s192
        %p194 = pneg %p102
        %p195 = pneg %p99
        %p196 = pneg %p130
        %p197 = pneg %p127
        %s198 = sand.u32 %s117, 1
        %s199 = scalar_lea.sflag [#allocation3], %s198
        %s200 = sand.u32 %s117, 1
        %s201 = smul.addr %s200, 64
        %s202 = scalar_lea.vmem [#allocation2], %s201
        %s203 = smul.u32 16, %s22
        %p204 = scmp.lt.s32.totalorder %s203, 31
        %s205 = scalar_select %p204, %s203, 31
        %s206 = smul.addr %s205, 4
        %s207 = scalar_lea.vmem %s0, %s206
        %s208 = smul.u32 16, %s22
        %p209 = scmp.lt.s32.totalorder %s21, 0
        %s210 = scalar_select %p209, %s21, 0
        %s211 = smul.addr %s210, 4
        %s212 = scalar_lea.vmem %s1, %s211
        %p213 = scmp.lt.s32.totalorder %s21, 0
        %s214 = scalar_select %p213, %s21, 0
        %s215 = scalar_lea.vmem %s2, %s214
        %s216 = smul.u32 16, %s22
        %v218 = vld [vmem:[%s207] sm:$0xf]
        %v219 = vld [vmem:[%s207 + $0x4] sm:$0xf]
        %v220 = vld [vmem:[%s207 + $0x8] sm:$0xf]
        %v221 = vld [vmem:[%s207 + $0xc] sm:$0xf]
        %v222 = vld [vmem:[%s207 + $0x10] sm:$0xf]
        %v223 = vld [vmem:[%s207 + $0x14] sm:$0xf]
        %v224 = vld [vmem:[%s207 + $0x18] sm:$0xf]
        %v225 = vld [vmem:[%s207 + $0x1c] sm:$0xf]
        %v226 = vld [vmem:[%s207 + $0x20] sm:$0xf]
        %v227 = vld [vmem:[%s207 + $0x24] sm:$0xf]
        %v228 = vld [vmem:[%s207 + $0x28] sm:$0xf]
        %v229 = vld [vmem:[%s207 + $0x2c] sm:$0xf]
        %v230 = vld [vmem:[%s207 + $0x30] sm:$0xf]
        %v231 = vld [vmem:[%s207 + $0x34] sm:$0xf]
        %v232 = vld [vmem:[%s207 + $0x38] sm:$0xf]
        %v233 = vld [vmem:[%s207 + $0x3c] sm:$0xf]
        %v234 = vld [vmem:[%s212] sm:$0xf]
        %v235 = vld [vmem:[%s212 + $0x4] sm:$0xf]
        %v236 = vld [vmem:[%s212 + $0x8] sm:$0xf]
        %v237 = vld [vmem:[%s212 + $0xc] sm:$0xf]
        %v238 = vld [vmem:[%s212 + $0x10] sm:$0xf]
        %v239 = vld [vmem:[%s212 + $0x14] sm:$0xf]
        %v240 = vld [vmem:[%s212 + $0x18] sm:$0xf]
        %v241 = vld [vmem:[%s212 + $0x1c] sm:$0xf]
        %v242 = vld [vmem:[%s215] sm:$0x1]
        %v244 = vperm.slane %v242, 0
        %v262 = vunpack.c.l.b16 %v218
        %v263 = vunpack.c.l.b16 %v219
        %v264 = vunpack.c.l.b16 %v220
        %v265 = vunpack.c.l.b16 %v221
        %v266 = vunpack.c.l.b16 %v222
        %v267 = vunpack.c.l.b16 %v223
        %v268 = vunpack.c.l.b16 %v224
        %v269 = vunpack.c.l.b16 %v225
        %v270 = vunpack.c.l.b16 %v226
        %v271 = vunpack.c.l.b16 %v227
        %v272 = vunpack.c.l.b16 %v228
        %v273 = vunpack.c.l.b16 %v229
        %v274 = vunpack.c.l.b16 %v230
        %v275 = vunpack.c.l.b16 %v231
        %v276 = vunpack.c.l.b16 %v232
        %v277 = vunpack.c.l.b16 %v233
        %v278 = vpack.c.b16 %v263, %v262
        %v279 = vpack.c.b16 %v265, %v264
        %v280 = vpack.c.b16 %v267, %v266
        %v281 = vpack.c.b16 %v269, %v268
        %v282 = vpack.c.b16 %v271, %v270
        %v283 = vpack.c.b16 %v273, %v272
        %v284 = vpack.c.b16 %v275, %v274
        %v285 = vpack.c.b16 %v277, %v276
        %v294 = vunpack.c.l.b16 %v234
        %v295 = vunpack.c.l.b16 %v235
        %v296 = vunpack.c.l.b16 %v236
        %v297 = vunpack.c.l.b16 %v237
        %v298 = vunpack.c.l.b16 %v238
        %v299 = vunpack.c.l.b16 %v239
        %v300 = vunpack.c.l.b16 %v240
        %v301 = vunpack.c.l.b16 %v241
        %v302 = vpack.c.b16 %v295, %v294
        %v303 = vpack.c.b16 %v297, %v296
        %v304 = vpack.c.b16 %v299, %v298
        %v305 = vpack.c.b16 %v301, %v300
        %vm310 = vcmask 523264
        %v312 = vsel %vm310, %v278, 0
        %v315 = vsel %vm310, %v279, 0
        %v318 = vsel %vm310, %v280, 0
        %v321 = vsel %vm310, %v281, 0
        %v324 = vsel %vm310, %v282, 0
        %v327 = vsel %vm310, %v283, 0
        %v330 = vsel %vm310, %v284, 0
        %v333 = vsel %vm310, %v285, 0
        %335 = vmatpush.bf16.msra.mxu0 0
        %336 = vmatpush.bf16.msra.mxu0 0
        %337 = vmatpush.bf16.msra.mxu0 0
        %338 = vmatpush.bf16.msra.mxu0 0
        %339 = vmatpush.bf16.msra.mxu0 %v305
        %340 = vmatpush.bf16.msra.mxu0 %v304
        %341 = vmatpush.bf16.msra.mxu0 %v303
        %342 = vmatpush.bf16.msra.mxu0 %v302
        %343 = vmatmul.bf16.gmra.mxu0 %v312
        %v344 = vpop.f32.mrf.mxu0
        %v345 = vadd.f32 %v244, %v344
        %v346 = vpop.f32.mrf.mxu0
        %v347 = vadd.f32 %v244, %v346
        %348 = vmatmul.bf16.gmra.mxu0 %v315
        %v349 = vpop.f32.mrf.mxu0
        %v350 = vadd.f32 %v244, %v349
        %v351 = vpop.f32.mrf.mxu0
        %v352 = vadd.f32 %v244, %v351
        %353 = vmatmul.bf16.gmra.mxu0 %v318
        %v354 = vpop.f32.mrf.mxu0
        %v355 = vadd.f32 %v244, %v354
        %v356 = vpop.f32.mrf.mxu0
        %v357 = vadd.f32 %v244, %v356
        %358 = vmatmul.bf16.gmra.mxu0 %v321
        %v359 = vpop.f32.mrf.mxu0
        %v360 = vadd.f32 %v244, %v359
        %v361 = vpop.f32.mrf.mxu0
        %v362 = vadd.f32 %v244, %v361
        %363 = vmatmul.bf16.gmra.mxu0 %v324
        %v364 = vpop.f32.mrf.mxu0
        %v365 = vadd.f32 %v244, %v364
        %v366 = vpop.f32.mrf.mxu0
        %v367 = vadd.f32 %v244, %v366
        %368 = vmatmul.bf16.gmra.mxu0 %v327
        %v369 = vpop.f32.mrf.mxu0
        %v370 = vadd.f32 %v244, %v369
        %v371 = vpop.f32.mrf.mxu0
        %v372 = vadd.f32 %v244, %v371
        %373 = vmatmul.bf16.gmra.mxu0 %v330
        %v374 = vpop.f32.mrf.mxu0
        %v375 = vadd.f32 %v244, %v374
        %v376 = vpop.f32.mrf.mxu0
        %v377 = vadd.f32 %v244, %v376
        %378 = vmatmul.bf16.gmra.mxu0 %v333
        %v379 = vpop.f32.mrf.mxu0
        %v380 = vadd.f32 %v244, %v379
        %v381 = vpop.f32.mrf.mxu0
        %v382 = vadd.f32 %v244, %v381
        %383 = vdwg.mxu0
        %v384 = vmax.f32 %v345, 0.0
        %v385 = vmax.f32 %v347, 0.0
        %v386 = vmax.f32 %v350, 0.0
        %v387 = vmax.f32 %v352, 0.0
        %v388 = vmax.f32 %v355, 0.0
        %v389 = vmax.f32 %v357, 0.0
        %v390 = vmax.f32 %v360, 0.0
        %v391 = vmax.f32 %v362, 0.0
        %v392 = vmax.f32 %v365, 0.0
        %v393 = vmax.f32 %v367, 0.0
        %v394 = vmax.f32 %v370, 0.0
        %v395 = vmax.f32 %v372, 0.0
        %v396 = vmax.f32 %v375, 0.0
        %v397 = vmax.f32 %v377, 0.0
        %v398 = vmax.f32 %v380, 0.0
        %v399 = vmax.f32 %v382, 0.0
        %v400 = vpack.c.bf16 %v384, %v384
        %v401 = vpack.c.bf16 %v385, %v385
        %v402 = vpack.c.bf16 %v386, %v386
        %v403 = vpack.c.bf16 %v387, %v387
        %v404 = vpack.c.bf16 %v388, %v388
        %v405 = vpack.c.bf16 %v389, %v389
        %v406 = vpack.c.bf16 %v390, %v390
        %v407 = vpack.c.bf16 %v391, %v391
        %v408 = vpack.c.bf16 %v392, %v392
        %v409 = vpack.c.bf16 %v393, %v393
        %v410 = vpack.c.bf16 %v394, %v394
        %v411 = vpack.c.bf16 %v395, %v395
        %v412 = vpack.c.bf16 %v396, %v396
        %v413 = vpack.c.bf16 %v397, %v397
        %v414 = vpack.c.bf16 %v398, %v398
        %v415 = vpack.c.bf16 %v399, %v399
        %416 = vst [vmem:[%s202] sm:$0xf] %v400
        %417 = vst [vmem:[%s202 + $0x4] sm:$0xf] %v401
        %418 = vst [vmem:[%s202 + $0x8] sm:$0xf] %v402
        %419 = vst [vmem:[%s202 + $0xc] sm:$0xf] %v403
        %420 = vst [vmem:[%s202 + $0x10] sm:$0xf] %v404
        %421 = vst [vmem:[%s202 + $0x14] sm:$0xf] %v405
        %422 = vst [vmem:[%s202 + $0x18] sm:$0xf] %v406
        %423 = vst [vmem:[%s202 + $0x1c] sm:$0xf] %v407
        %424 = vst [vmem:[%s202 + $0x20] sm:$0xf] %v408
        %425 = vst [vmem:[%s202 + $0x24] sm:$0xf] %v409
        %426 = vst [vmem:[%s202 + $0x28] sm:$0xf] %v410
        %427 = vst [vmem:[%s202 + $0x2c] sm:$0xf] %v411
        %428 = vst [vmem:[%s202 + $0x30] sm:$0xf] %v412
        %429 = vst [vmem:[%s202 + $0x34] sm:$0xf] %v413
        %430 = vst [vmem:[%s202 + $0x38] sm:$0xf] %v414
        %431 = vst [vmem:[%s202 + $0x3c] sm:$0xf] %v415
        %s432 = sand.u32 %s117, 1
        %s433 = scalar_lea.sflag [#allocation3], %s432
        %s434 = sand.u32 %s117, 1
        %s435 = smul.addr %s434, 64
        %s436 = scalar_lea.vmem [#allocation2], %s435
        // Predicated region
        $region33: #{tpu_custom_call.1} parent=31 // pred_check
          %p437 = pneg %p127
        $region34: #{tpu_custom_call.1} parent=31 // pred_check_branch
          %439 = sbr.rel (%p437) target = $region36
        $region35: #{tpu_custom_call.1} parent=31 // pred_region
          %s440 = smul.u32 16, %s22
          %442 = vsyncadd %s433, 0
          %s443 = sadd.s32 %s21, %s440
          %s444 = smul.addr %s443, 4
          %s445 = scalar_lea.hbm %s3, %s444
          %s446 = sshll.u32 %s436, 4
          %s447 = int_to_ptr.vmem [resolvable:$true] %s446
          %s448 = sshll.u32 %s445, 4
          %s449 = int_to_ptr.hbm [resolvable:$true] %s448
          %454 = dma.vmem_to_hbm [thread:$0]  %s447, 1024, %s449, %s433, 64, 64, 4
        $region36: #{tpu_custom_call.1} parent=31 // pred_fallthru
          _
      $region32: #{tpu_custom_call.1} parent=5 // pred_fallthru
        _
      %p455 = scmp.le.s32.totalorder 2, %s12
      // Predicated region
      $region37: #{tpu_custom_call.1} parent=5 // pred_check
        %p456 = pneg %p455
      $region38: #{tpu_custom_call.1} parent=5 // pred_check_branch
        %458 = sbr.rel (%p456) target = $region40
      $region39: #{tpu_custom_call.1} parent=5 // pred_region
        %s459 = ssub.s32 %s12, 2
        // Predicated region
        $region41: #{tpu_custom_call.1} parent=39 // pred_check
          %p460 = pneg %p133
        $region42: #{tpu_custom_call.1} parent=39 // pred_check_branch
          %462 = sbr.rel (%p460) target = $region44
        $region43: #{tpu_custom_call.1} parent=39 // pred_region
          %s463 = sand.u32 %s118, 1
          %s464 = scalar_lea.sflag [#allocation3], %s463
          %s465 = sand.u32 %s118, 1
          %s466 = smul.addr %s465, 64
          %s467 = scalar_lea.vmem [#allocation2], %s466
          %469 = dma.done %s464, 1024
        $region44: #{tpu_custom_call.1} parent=39 // pred_fallthru
          _
      $region40: #{tpu_custom_call.1} parent=5 // pred_fallthru
        _
    $region6: #{tpu_custom_call.1} parent=1 // loop_footer
      %s16 = sadd.s32 1, %s12
    $region7: #{tpu_custom_call.1} parent=1 // loop_footer_branch
      %11 = sbr.rel target = $region3
    $region8: #{tpu_custom_call.1} parent=1 // loop_exit
      _
    %470 = vsyncpa [#allocation3], 1
    %s471 = scalar_lea.sflag [#allocation3], 1
    %472 = vsyncpa %s471, 1

// kernel: tpu_custom_call.1
$region0: #{tpu_custom_call.1}
  #allocation0 [shape = 'u32[]', space=smem, size = 0x4, offset = 0x4, fixed_abs, tag = 'smem constant byte address 0x4 - core index']
  #allocation1 [shape = 'u32[72,128]{1,0:T(1,128)}', space=vmem, size = 0x9000, scoped, tag = 'internal scratch']
  %s0 = inlined_call_operand.vmem [shape: bf16[256,64], index: 0, kind: input, shape index: {}]
  %s1 = inlined_call_operand.vmem [shape: bf16[64,128], index: 1, kind: input, shape index: {}]
  %s2 = inlined_call_operand.vmem [shape: f32[1,128], index: 2, kind: input, shape index: {}]
  %s3 = inlined_call_operand.hbm [shape: bf16[256,128], index: 3, kind: output, shape index: {}]
  %s4 = sld [smem:[#allocation0]]
  $region45: #{tpu_custom_call.1} parent=0
    _
  %s6 = ssub.s32 1, %s4
  %s7 = scalar_select 0, %s6, %s4
  $region1: #{tpu_custom_call.1} parent=0
    #allocation2 [shape = 'u8[65536]{0}', space=vmem, size = 0x10000, scoped, tag = 'output window, operand 0']
    #allocation3 [shape = 's32[2]{0}', space=sflag, size = 0x8, scoped, tag = 'scoped memory for tpu_custom_call.1']
    %8 = vsyncpa [#allocation3], 0
    %s9 = scalar_lea.sflag [#allocation3], 1
    %10 = vsyncpa %s9, 0
    loop: start=0, step=1, limit=4
    $region2: #{tpu_custom_call.1} parent=1 // loop_pre_header
      _
    $region3: #{tpu_custom_call.1} parent=1 // loop_header
      %s12 = sphi 0, %s16
      %p13 = scmp.ge.s32.totalorder %s12, 4
      %s19 = sphi 0, %s31
      %s20 = sphi 0, %s27
      %s21 = sphi 0, %s19
      %s22 = sphi 0, %s20
      %s23 = sphi 0, %s21
      %s24 = sphi 0, %s22
      %s34 = sphi 0, %s36
      %s37 = sphi 0, %s34
      %s38 = sphi 0, %s37
      %s54 = sphi 0, %s38
      %s60 = sphi 0, %s62
      %s63 = sphi 0, %s60
      %s64 = sphi 0, %s63
      %s80 = sphi 0, %s64
      %s86 = sphi 0, %s88
      %s89 = sphi 0, %s86
      %s90 = sphi 0, %s89
      %s106 = sphi 0, %s90
      %s114 = sphi 0, %s116
      %s117 = sphi 0, %s114
      %s118 = sphi 0, %s117
      %s134 = sphi 0, %s118
    $region4: #{tpu_custom_call.1} parent=1 // loop_header_branch
      %15 = sbr.rel (%p13) target = $region8
    $region5: #{tpu_custom_call.1} parent=1 // loop_body
      %s17 = ssub.s32 %s12, 1
      %s18 = ssub.s32 %s12, 2
      %s25 = sadd.s32 1, %s20
      %p26 = scmp.ge.s32.totalorder %s25, 2
      %s27 = scalar_select %p26, 0, %s25
      %s28 = sadd.s32 1, %s19
      %s29 = scalar_select %p26, %s28, %s19
      %p30 = scmp.ge.s32.totalorder %s29, 1
      %s31 = scalar_select %p30, 0, %s29
      %s32 = ssub.s32 %s20, %s27
      %p33 = scmp.eq.s32.totalorder %s32, 0
      %s35 = sadd.s32 %s34, 1
      %s36 = scalar_select %p33, %s34, %s35
      %p39 = pneg %p33
      %p40 = scmp.eq.s32.totalorder %s12, 1
      %p41 = por %p39, %p40
      %p42 = scmp.ne.s32.totalorder %s34, %s37
      %p43 = scmp.eq.s32.totalorder %s12, 0
      %p44 = por %p42, %p43
      %p45 = scmp.ne.s32.totalorder %s34, %s37
      %p46 = scmp.eq.s32.totalorder %s17, 1
      %p47 = por %p45, %p46
      %p48 = scmp.ne.s32.totalorder %s37, %s38
      %p49 = scmp.eq.s32.totalorder %s17, 0
      %p50 = por %p48, %p49
      %p51 = scmp.ne.s32.totalorder %s37, %s38
      %p52 = scmp.eq.s32.totalorder %s18, 1
      %p53 = por %p51, %p52
      %p55 = scmp.ne.s32.totalorder %s38, %s54
      %p56 = scmp.eq.s32.totalorder %s18, 0
      %p57 = por %p55, %p56
      %s58 = ssub.s32 %s19, %s31
      %p59 = scmp.eq.s32.totalorder %s58, 0
      %s61 = sadd.s32 %s60, 1
      %s62 = scalar_select %p59, %s60, %s61
      %p65 = pneg %p59
      %p66 = scmp.eq.s32.totalorder %s12, 1
      %p67 = por %p65, %p66
      %p68 = scmp.ne.s32.totalorder %s60, %s63
      %p69 = scmp.eq.s32.totalorder %s12, 0
      %p70 = por %p68, %p69
      %p71 = scmp.ne.s32.totalorder %s60, %s63
      %p72 = scmp.eq.s32.totalorder %s17, 1
      %p73 = por %p71, %p72
      %p74 = scmp.ne.s32.totalorder %s63, %s64
      %p75 = scmp.eq.s32.totalorder %s17, 0
      %p76 = por %p74, %p75
      %p77 = scmp.ne.s32.totalorder %s63, %s64
      %p78 = scmp.eq.s32.totalorder %s18, 1
      %p79 = por %p77, %p78
      %p81 = scmp.ne.s32.totalorder %s64, %s80
      %p82 = scmp.eq.s32.totalorder %s18, 0
      %p83 = por %p81, %p82
      %s84 = ssub.s32 %s19, %s31
      %p85 = scmp.eq.s32.totalorder %s84, 0
      %s87 = sadd.s32 %s86, 1
      %s88 = scalar_select %p85, %s86, %s87
      %p91 = pneg %p85
      %p92 = scmp.eq.s32.totalorder %s12, 1
      %p93 = por %p91, %p92
      %p94 = scmp.ne.s32.totalorder %s86, %s89
      %p95 = scmp.eq.s32.totalorder %s12, 0
      %p96 = por %p94, %p95
      %p97 = scmp.ne.s32.totalorder %s86, %s89
      %p98 = scmp.eq.s32.totalorder %s17, 1
      %p99 = por %p97, %p98
      %p100 = scmp.ne.s32.totalorder %s89, %s90
      %p101 = scmp.eq.s32.totalorder %s17, 0
      %p102 = por %p100, %p101
      %p103 = scmp.ne.s32.totalorder %s89, %s90
      %p104 = scmp.eq.s32.totalorder %s18, 1
      %p105 = por %p103, %p104
      %p107 = scmp.ne.s32.totalorder %s90, %s106
      %p108 = scmp.eq.s32.totalorder %s18, 0
      %p109 = por %p107, %p108
      %s110 = ssub.s32 %s20, %s27
      %s111 = ssub.s32 %s19, %s31
      %s112 = sor.u32 %s110, %s111
      %p113 = scmp.eq.s32.totalorder %s112, 0
      %s115 = sadd.s32 %s114, 1
      %s116 = scalar_select %p113, %s114, %s115
      %p119 = pneg %p113
      %p120 = scmp.eq.s32.totalorder %s12, 1
      %p121 = por %p119, %p120
      %p122 = scmp.ne.s32.totalorder %s114, %s117
      %p123 = scmp.eq.s32.totalorder %s12, 0
      %p124 = por %p122, %p123
      %p125 = scmp.ne.s32.totalorder %s114, %s117
      %p126 = scmp.eq.s32.totalorder %s17, 1
      %p127 = por %p125, %p126
      %p128 = scmp.ne.s32.totalorder %s117, %s118
      %p129 = scmp.eq.s32.totalorder %s17, 0
      %p130 = por %p128, %p129
      %p131 = scmp.ne.s32.totalorder %s117, %s118
      %p132 = scmp.eq.s32.totalorder %s18, 1
      %p133 = por %p131, %p132
      %p135 = scmp.ne.s32.totalorder %s118, %s134
      %p136 = scmp.eq.s32.totalorder %s18, 0
      %p137 = por %p135, %p136
      %p138 = scmp.le.s32.totalorder 1, %s12
      %p139 = scmp.lt.s32.totalorder %s12, 3
      %p140 = pnand %p138, %p139
      %p141 = pneg %p140
      // Predicated region
      $region9: #{tpu_custom_call.1} parent=5 // pred_check
        _
      $region10: #{tpu_custom_call.1} parent=5 // pred_check_branch
        %143 = sbr.rel (%p140) target = $region12
      $region11: #{tpu_custom_call.1} parent=5 // pred_region
        %s144 = ssub.s32 %s12, 1
        // Predicated region
        $region13: #{tpu_custom_call.1} parent=11 // pred_check
          %p145 = pneg %p76
        $region14: #{tpu_custom_call.1} parent=11 // pred_check_branch
          %147 = sbr.rel (%p145) target = $region16
        $region15: #{tpu_custom_call.1} parent=11 // pred_region
          %p148 = scmp.lt.s32.totalorder %s21, 0
          %s149 = scalar_select %p148, %s21, 0
          %s150 = smul.addr %s149, 4
          %s151 = scalar_lea.vmem %s1, %s150
        $region16: #{tpu_custom_call.1} parent=11 // pred_fallthru
          _
        // Predicated region
        $region17: #{tpu_custom_call.1} parent=11 // pred_check
          %p152 = pneg %p102
        $region18: #{tpu_custom_call.1} parent=11 // pred_check_branch
          %154 = sbr.rel (%p152) target = $region20
        $region19: #{tpu_custom_call.1} parent=11 // pred_region
          %p155 = scmp.lt.s32.totalorder %s21, 0
          %s156 = scalar_select %p155, %s21, 0
          %s157 = scalar_lea.vmem %s2, %s156
        $region20: #{tpu_custom_call.1} parent=11 // pred_fallthru
          _
      $region12: #{tpu_custom_call.1} parent=5 // pred_fallthru
        _
      %p158 = scmp.lt.s32.totalorder %s12, 2
      // Predicated region
      $region21: #{tpu_custom_call.1} parent=5 // pred_check
        %p159 = pneg %p158
      $region22: #{tpu_custom_call.1} parent=5 // pred_check_branch
        %161 = sbr.rel (%p159) target = $region24
      $region23: #{tpu_custom_call.1} parent=5 // pred_region
        // Predicated region
        $region25: #{tpu_custom_call.1} parent=23 // pred_check
          %p162 = pneg %p44
        $region26: #{tpu_custom_call.1} parent=23 // pred_check_branch
          %164 = sbr.rel (%p162) target = $region28
        $region27: #{tpu_custom_call.1} parent=23 // pred_region
          %s165 = smul.u32 16, %s20
          %p166 = scmp.lt.s32.totalorder %s165, 31
          %s167 = scalar_select %p166, %s165, 31
          %s168 = smul.addr %s167, 4
          %s169 = scalar_lea.vmem %s0, %s168
          %s170 = smul.u32 16, %s20
        $region28: #{tpu_custom_call.1} parent=23 // pred_fallthru
          _
      $region24: #{tpu_custom_call.1} parent=5 // pred_fallthru
        _
      %p171 = scmp.le.s32.totalorder 1, %s12
      %p172 = scmp.lt.s32.totalorder %s12, 3
      %p173 = pnand %p171, %p172
      %p174 = pneg %p173
      // Predicated region
      $region29: #{tpu_custom_call.1} parent=5 // pred_check
        _
      $region30: #{tpu_custom_call.1} parent=5 // pred_check_branch
        %176 = sbr.rel (%p173) target = $region32
      $region31: #{tpu_custom_call.1} parent=5 // pred_region
        %s177 = ssub.s32 %s12, 1
        %s178 = smul.u32 16, %s22
        %p179 = scmp.lt.s32.totalorder %s178, 31
        %s180 = scalar_select %p179, %s178, 31
        %s181 = smul.addr %s180, 4
        %s182 = scalar_lea.vmem %s0, %s181
        %p183 = pneg %p50
        %p184 = pneg %p47
        %p185 = scmp.lt.s32.totalorder %s21, 0
        %s186 = scalar_select %p185, %s21, 0
        %s187 = smul.addr %s186, 4
        %s188 = scalar_lea.vmem %s1, %s187
        %p189 = pneg %p76
        %p190 = pneg %p73
        %p191 = scmp.lt.s32.totalorder %s21, 0
        %s192 = scalar_select %p191, %s21, 0
        %s193 = scalar_lea.vmem %s2, %s192
        %p194 = pneg %p102
        %p195 = pneg %p99
        %p196 = pneg %p130
        %p197 = pneg %p127
        %s198 = sand.u32 %s117, 1
        %s199 = scalar_lea.sflag [#allocation3], %s198
        %s200 = sand.u32 %s117, 1
        %s201 = smul.addr %s200, 64
        %s202 = scalar_lea.vmem [#allocation2], %s201
        %s203 = smul.u32 16, %s22
        %p204 = scmp.lt.s32.totalorder %s203, 31
        %s205 = scalar_select %p204, %s203, 31
        %s206 = smul.addr %s205, 4
        %s207 = scalar_lea.vmem %s0, %s206
        %s208 = smul.u32 16, %s22
        %p209 = scmp.lt.s32.totalorder %s21, 0
        %s210 = scalar_select %p209, %s21, 0
        %s211 = smul.addr %s210, 4
        %s212 = scalar_lea.vmem %s1, %s211
        %p213 = scmp.lt.s32.totalorder %s21, 0
        %s214 = scalar_select %p213, %s21, 0
        %s215 = scalar_lea.vmem %s2, %s214
        %s216 = smul.u32 16, %s22
        %v218 = vld [vmem:[%s207] sm:$0xf]
        %v219 = vld [vmem:[%s207 + $0x4] sm:$0xf]
        %v220 = vld [vmem:[%s207 + $0x8] sm:$0xf]
        %v221 = vld [vmem:[%s207 + $0xc] sm:$0xf]
        %v222 = vld [vmem:[%s207 + $0x10] sm:$0xf]
        %v223 = vld [vmem:[%s207 + $0x14] sm:$0xf]
        %v224 = vld [vmem:[%s207 + $0x18] sm:$0xf]
        %v225 = vld [vmem:[%s207 + $0x1c] sm:$0xf]
        %v226 = vld [vmem:[%s207 + $0x20] sm:$0xf]
        %v227 = vld [vmem:[%s207 + $0x24] sm:$0xf]
        %v228 = vld [vmem:[%s207 + $0x28] sm:$0xf]
        %v229 = vld [vmem:[%s207 + $0x2c] sm:$0xf]
        %v230 = vld [vmem:[%s207 + $0x30] sm:$0xf]
        %v231 = vld [vmem:[%s207 + $0x34] sm:$0xf]
        %v232 = vld [vmem:[%s207 + $0x38] sm:$0xf]
        %v233 = vld [vmem:[%s207 + $0x3c] sm:$0xf]
        %v234 = vld [vmem:[%s212] sm:$0xf]
        %v235 = vld [vmem:[%s212 + $0x4] sm:$0xf]
        %v236 = vld [vmem:[%s212 + $0x8] sm:$0xf]
        %v237 = vld [vmem:[%s212 + $0xc] sm:$0xf]
        %v238 = vld [vmem:[%s212 + $0x10] sm:$0xf]
        %v239 = vld [vmem:[%s212 + $0x14] sm:$0xf]
        %v240 = vld [vmem:[%s212 + $0x18] sm:$0xf]
        %v241 = vld [vmem:[%s212 + $0x1c] sm:$0xf]
        %v242 = vld [vmem:[%s215] sm:$0x1]
        %v244 = vperm.slane %v242, 0
        %v262 = vunpack.c.l.b16 %v218
        %v263 = vunpack.c.l.b16 %v219
        %v264 = vunpack.c.l.b16 %v220
        %v265 = vunpack.c.l.b16 %v221
        %v266 = vunpack.c.l.b16 %v222
        %v267 = vunpack.c.l.b16 %v223
        %v268 = vunpack.c.l.b16 %v224
        %v269 = vunpack.c.l.b16 %v225
        %v270 = vunpack.c.l.b16 %v226
        %v271 = vunpack.c.l.b16 %v227
        %v272 = vunpack.c.l.b16 %v228
        %v273 = vunpack.c.l.b16 %v229
        %v274 = vunpack.c.l.b16 %v230
        %v275 = vunpack.c.l.b16 %v231
        %v276 = vunpack.c.l.b16 %v232
        %v277 = vunpack.c.l.b16 %v233
        %v278 = vpack.c.b16 %v263, %v262
        %v279 = vpack.c.b16 %v265, %v264
        %v280 = vpack.c.b16 %v267, %v266
        %v281 = vpack.c.b16 %v269, %v268
        %v282 = vpack.c.b16 %v271, %v270
        %v283 = vpack.c.b16 %v273, %v272
        %v284 = vpack.c.b16 %v275, %v274
        %v285 = vpack.c.b16 %v277, %v276
        %v294 = vunpack.c.l.b16 %v234
        %v295 = vunpack.c.l.b16 %v235
        %v296 = vunpack.c.l.b16 %v236
        %v297 = vunpack.c.l.b16 %v237
        %v298 = vunpack.c.l.b16 %v238
        %v299 = vunpack.c.l.b16 %v239
        %v300 = vunpack.c.l.b16 %v240
        %v301 = vunpack.c.l.b16 %v241
        %v302 = vpack.c.b16 %v295, %v294
        %v303 = vpack.c.b16 %v297, %v296
        %v304 = vpack.c.b16 %v299, %v298
        %v305 = vpack.c.b16 %v301, %v300
        %vm310 = vcmask 523264
        %v312 = vsel %vm310, %v278, 0
        %v315 = vsel %vm310, %v279, 0
        %v318 = vsel %vm310, %v280, 0
        %v321 = vsel %vm310, %v281, 0
        %v324 = vsel %vm310, %v282, 0
        %v327 = vsel %vm310, %v283, 0
        %v330 = vsel %vm310, %v284, 0
        %v333 = vsel %vm310, %v285, 0
        %335 = vmatpush.bf16.msra.mxu0 0
        %336 = vmatpush.bf16.msra.mxu0 0
        %337 = vmatpush.bf16.msra.mxu0 0
        %338 = vmatpush.bf16.msra.mxu0 0
        %339 = vmatpush.bf16.msra.mxu0 %v305
        %340 = vmatpush.bf16.msra.mxu0 %v304
        %341 = vmatpush.bf16.msra.mxu0 %v303
        %342 = vmatpush.bf16.msra.mxu0 %v302
        %343 = vmatmul.bf16.gmra.mxu0 %v312
        %v344 = vpop.f32.mrf.mxu0
        %v345 = vadd.f32 %v244, %v344
        %v346 = vpop.f32.mrf.mxu0
        %v347 = vadd.f32 %v244, %v346
        %348 = vmatmul.bf16.gmra.mxu0 %v315
        %v349 = vpop.f32.mrf.mxu0
        %v350 = vadd.f32 %v244, %v349
        %v351 = vpop.f32.mrf.mxu0
        %v352 = vadd.f32 %v244, %v351
        %353 = vmatmul.bf16.gmra.mxu0 %v318
        %v354 = vpop.f32.mrf.mxu0
        %v355 = vadd.f32 %v244, %v354
        %v356 = vpop.f32.mrf.mxu0
        %v357 = vadd.f32 %v244, %v356
        %358 = vmatmul.bf16.gmra.mxu0 %v321
        %v359 = vpop.f32.mrf.mxu0
        %v360 = vadd.f32 %v244, %v359
        %v361 = vpop.f32.mrf.mxu0
        %v362 = vadd.f32 %v244, %v361
        %363 = vmatmul.bf16.gmra.mxu0 %v324
        %v364 = vpop.f32.mrf.mxu0
        %v365 = vadd.f32 %v244, %v364
        %v366 = vpop.f32.mrf.mxu0
        %v367 = vadd.f32 %v244, %v366
        %368 = vmatmul.bf16.gmra.mxu0 %v327
        %v369 = vpop.f32.mrf.mxu0
        %v370 = vadd.f32 %v244, %v369
        %v371 = vpop.f32.mrf.mxu0
        %v372 = vadd.f32 %v244, %v371
        %373 = vmatmul.bf16.gmra.mxu0 %v330
        %v374 = vpop.f32.mrf.mxu0
        %v375 = vadd.f32 %v244, %v374
        %v376 = vpop.f32.mrf.mxu0
        %v377 = vadd.f32 %v244, %v376
        %378 = vmatmul.bf16.gmra.mxu0 %v333
        %v379 = vpop.f32.mrf.mxu0
        %v380 = vadd.f32 %v244, %v379
        %v381 = vpop.f32.mrf.mxu0
        %v382 = vadd.f32 %v244, %v381
        %383 = vdwg.mxu0
        %v384 = vmax.f32 %v345, 0.0
        %v385 = vmax.f32 %v347, 0.0
        %v386 = vmax.f32 %v350, 0.0
        %v387 = vmax.f32 %v352, 0.0
        %v388 = vmax.f32 %v355, 0.0
        %v389 = vmax.f32 %v357, 0.0
        %v390 = vmax.f32 %v360, 0.0
        %v391 = vmax.f32 %v362, 0.0
        %v392 = vmax.f32 %v365, 0.0
        %v393 = vmax.f32 %v367, 0.0
        %v394 = vmax.f32 %v370, 0.0
        %v395 = vmax.f32 %v372, 0.0
        %v396 = vmax.f32 %v375, 0.0
        %v397 = vmax.f32 %v377, 0.0
        %v398 = vmax.f32 %v380, 0.0
        %v399 = vmax.f32 %v382, 0.0
        %v400 = vpack.c.bf16 %v384, %v384
        %v401 = vpack.c.bf16 %v385, %v385
        %v402 = vpack.c.bf16 %v386, %v386
        %v403 = vpack.c.bf16 %v387, %v387
        %v404 = vpack.c.bf16 %v388, %v388
        %v405 = vpack.c.bf16 %v389, %v389
        %v406 = vpack.c.bf16 %v390, %v390
        %v407 = vpack.c.bf16 %v391, %v391
        %v408 = vpack.c.bf16 %v392, %v392
        %v409 = vpack.c.bf16 %v393, %v393
        %v410 = vpack.c.bf16 %v394, %v394
        %v411 = vpack.c.bf16 %v395, %v395
        %v412 = vpack.c.bf16 %v396, %v396
        %v413 = vpack.c.bf16 %v397, %v397
        %v414 = vpack.c.bf16 %v398, %v398
        %v415 = vpack.c.bf16 %v399, %v399
        %416 = vst [vmem:[%s202] sm:$0xf] %v400
        %417 = vst [vmem:[%s202 + $0x4] sm:$0xf] %v401
        %418 = vst [vmem:[%s202 + $0x8] sm:$0xf] %v402
        %419 = vst [vmem:[%s202 + $0xc] sm:$0xf] %v403
        %420 = vst [vmem:[%s202 + $0x10] sm:$0xf] %v404
        %421 = vst [vmem:[%s202 + $0x14] sm:$0xf] %v405
        %422 = vst [vmem:[%s202 + $0x18] sm:$0xf] %v406
        %423 = vst [vmem:[%s202 + $0x1c] sm:$0xf] %v407
        %424 = vst [vmem:[%s202 + $0x20] sm:$0xf] %v408
        %425 = vst [vmem:[%s202 + $0x24] sm:$0xf] %v409
        %426 = vst [vmem:[%s202 + $0x28] sm:$0xf] %v410
        %427 = vst [vmem:[%s202 + $0x2c] sm:$0xf] %v411
        %428 = vst [vmem:[%s202 + $0x30] sm:$0xf] %v412
        %429 = vst [vmem:[%s202 + $0x34] sm:$0xf] %v413
        %430 = vst [vmem:[%s202 + $0x38] sm:$0xf] %v414
        %431 = vst [vmem:[%s202 + $0x3c] sm:$0xf] %v415
        %s432 = sand.u32 %s117, 1
        %s433 = scalar_lea.sflag [#allocation3], %s432
        %s434 = sand.u32 %s117, 1
        %s435 = smul.addr %s434, 64
        %s436 = scalar_lea.vmem [#allocation2], %s435
        // Predicated region
        $region33: #{tpu_custom_call.1} parent=31 // pred_check
          %p437 = pneg %p127
        $region34: #{tpu_custom_call.1} parent=31 // pred_check_branch
          %439 = sbr.rel (%p437) target = $region36
        $region35: #{tpu_custom_call.1} parent=31 // pred_region
          %s440 = smul.u32 16, %s22
          %442 = vsyncadd %s433, 0
          %s443 = sadd.s32 %s21, %s440
          %s444 = smul.addr %s443, 4
          %s445 = scalar_lea.hbm %s3, %s444
          %s446 = sshll.u32 %s436, 4
          %s447 = int_to_ptr.vmem [resolvable:$true] %s446
          %s448 = sshll.u32 %s445, 4
          %s449 = int_to_ptr.hbm [resolvable:$true] %s448
          %454 = dma.vmem_to_hbm [thread:$0]  %s447, 1024, %s449, %s433, 64, 64, 4
        $region36: #{tpu_custom_call.1} parent=31 // pred_fallthru
          _
      $region32: #{tpu_custom_call.1} parent=5 // pred_fallthru
        _
      %p455 = scmp.le.s32.totalorder 2, %s12
      // Predicated region
      $region37: #{tpu_custom_call.1} parent=5 // pred_check
        %p456 = pneg %p455
      $region38: #{tpu_custom_call.1} parent=5 // pred_check_branch
        %458 = sbr.rel (%p456) target = $region40
      $region39: #{tpu_custom_call.1} parent=5 // pred_region
        %s459 = ssub.s32 %s12, 2
        // Predicated region
        $region41: #{tpu_custom_call.1} parent=39 // pred_check
          %p460 = pneg %p133
        $region42: #{tpu_custom_call.1} parent=39 // pred_check_branch
          %462 = sbr.rel (%p460) target = $region44
        $region43: #{tpu_custom_call.1} parent=39 // pred_region
          %s463 = sand.u32 %s118, 1
          %s464 = scalar_lea.sflag [#allocation3], %s463
          %s465 = sand.u32 %s118, 1
          %s466 = smul.addr %s465, 64
          %s467 = scalar_lea.vmem [#allocation2], %s466
          %469 = dma.done %s464, 1024
        $region44: #{tpu_custom_call.1} parent=39 // pred_fallthru
          _
      $region40: #{tpu_custom_call.1} parent=5 // pred_fallthru
        _
    $region6: #{tpu_custom_call.1} parent=1 // loop_footer
      %s16 = sadd.s32 1, %s12
    $region7: #{tpu_custom_call.1} parent=1 // loop_footer_branch
      %11 = sbr.rel target = $region3
    $region8: #{tpu_custom_call.1} parent=1 // loop_exit
      _
    %470 = vsyncpa [#allocation3], 1
    %s471 = scalar_lea.sflag [#allocation3], 1
    %472 = vsyncpa %s471, 1

</llo_original>
